<compile_context>
chip_gen: v7x
topology: tpu7x:2x2x1
jax: 0.10.0
libtpu: 0.0.40
codegen_flags: <defaults>
</compile_context>

<pallas_src>
import functools

import jax
import jax.numpy as jnp
from jax import lax
from jax.experimental import pallas as pl
from jax.experimental.pallas import tpu as pltpu


def _round_up(x: int, m: int) -> int:
    return ((x + m - 1) // m) * m


# ----------------------------- use_conv=True --------------------------------

def _downsample_conv_kernel(x_ref, w_ref, b_ref, o_ref):
    # x_ref: (1, K*C, TL)  im2col'd taps for this (batch, lane-tile)
    # w_ref: (O, K*C)      folded conv weight
    # b_ref: (O, 1)        bias
    # o_ref: (1, O, TL)
    y = jnp.dot(w_ref[...], x_ref[0],
                preferred_element_type=jnp.float32)          # single MXU matmul
    o_ref[0] = (y + b_ref[...]).astype(o_ref.dtype)


def downsample_conv(x, weight, bias, *, factor=4, ksize=5, pad=2):
    """x: (B, C, L); weight: (O, C, K) (PyTorch Conv1d layout); bias: (O,)."""
    B, C, L = x.shape
    O, C_w, K = weight.shape
    assert C_w == C and K == ksize
    S = factor
    L_out = (L + 2 * pad - K) // S + 1

    # ---- wrapper-side layout plumbing (cheap XLA ops, no compute hoisted) ---
    need = (L_out - 1) * S + K                     # last padded index needed + 1
    pad_r = max(0, need - (L + pad))
    x_p = jnp.pad(x, ((0, 0), (0, 0), (pad, pad_r)))
    # tap k picks columns k, k+S, ..., k+(L_out-1)*S   -> (B, K, C, L_out)
    taps = jnp.stack(
        [lax.slice_in_dim(x_p, k, k + (L_out - 1) * S + 1, stride=S, axis=2)
         for k in range(K)], axis=1)
    taps = taps.reshape(B, K * C, L_out)           # contraction axis = K*C

    # lane-dense padding + lane tiling of the output length
    TL = min(512, _round_up(L_out, 128))
    Lp = _round_up(L_out, TL)
    if Lp != L_out:
        taps = jnp.pad(taps, ((0, 0), (0, 0), (0, Lp - L_out)))

    # fold (O, C, K) conv weight into the matching (O, K*C) matmul operand
    w_mat = jnp.transpose(weight, (0, 2, 1)).reshape(O, K * C)
    b_col = bias.reshape(O, 1)

    n_l = Lp // TL
    out = pl.pallas_call(
        _downsample_conv_kernel,
        out_shape=jax.ShapeDtypeStruct((B, O, Lp), x.dtype),
        grid_spec=pltpu.PrefetchScalarGridSpec(
            num_scalar_prefetch=0,
            grid=(B, n_l),
            in_specs=[
                pl.BlockSpec((1, K * C, TL), lambda b, j: (b, 0, j)),
                pl.BlockSpec((O, K * C), lambda b, j: (0, 0)),
                pl.BlockSpec((O, 1), lambda b, j: (0, 0)),
            ],
            out_specs=pl.BlockSpec((1, O, TL), lambda b, j: (b, 0, j)),
        ),
        compiler_params=pltpu.CompilerParams(
            dimension_semantics=("parallel", "parallel")),
    )(taps, w_mat, b_col)
    return out[:, :, :L_out]


# ----------------------------- use_conv=False -------------------------------

def _downsample_avgpool_kernel(x_ref, o_ref, *, factor):
    # x_ref: (1, factor, C, TL)  -> o_ref: (1, C, TL)
    acc = x_ref[0, 0].astype(jnp.float32)
    for r in range(1, factor):
        acc = acc + x_ref[0, r].astype(jnp.float32)
    o_ref[0] = (acc * (1.0 / factor)).astype(o_ref.dtype)


def downsample_avgpool(x, *, factor=4):
    """x: (B, C, L) -> AvgPool1d(kernel_size=factor, stride=factor)."""
    B, C, L = x.shape
    S = factor
    L_out = L // S
    # phase-r slabs: columns r, r+S, ..., r+(L_out-1)*S  -> (B, S, C, L_out)
    taps = jnp.stack(
        [lax.slice_in_dim(x, r, r + (L_out - 1) * S + 1, stride=S, axis=2)
         for r in range(S)], axis=1)

    TL = min(512, _round_up(L_out, 128))
    Lp = _round_up(L_out, TL)
    if Lp != L_out:
        taps = jnp.pad(taps, ((0, 0), (0, 0), (0, 0), (0, Lp - L_out)))

    n_l = Lp // TL
    kernel = functools.partial(_downsample_avgpool_kernel, factor=S)
    out = pl.pallas_call(
        kernel,
        out_shape=jax.ShapeDtypeStruct((B, C, Lp), x.dtype),
        grid_spec=pltpu.PrefetchScalarGridSpec(
            num_scalar_prefetch=0,
            grid=(B, n_l),
            in_specs=[pl.BlockSpec((1, S, C, TL), lambda b, j: (b, 0, 0, j))],
            out_specs=pl.BlockSpec((1, C, TL), lambda b, j: (b, 0, j)),
        ),
        compiler_params=pltpu.CompilerParams(
            dimension_semantics=("parallel", "parallel")),
    )(taps)
    return out[:, :, :L_out]


# ------------------------------- module API ---------------------------------

def downsample_forward(x, *, use_conv, weight=None, bias=None,
                       factor=4, ksize=5, pad=2):
    """Forward pass of Downsample. x: (B, channels, L)."""
    assert x.ndim == 3
    if use_conv:
        assert weight is not None and bias is not None
        assert x.shape[1] == weight.shape[1]
        return downsample_conv(x, weight, bias, factor=factor, ksize=ksize, pad=pad)
    return downsample_avgpool(x, factor=factor)


# ------------------------------- references ---------------------------------

def downsample_conv_reference(x, weight, bias, *, factor=4, pad=2):
    out = lax.conv_general_dilated(
        x.astype(jnp.float32), weight.astype(jnp.float32),
        window_strides=(factor,), padding=[(pad, pad)],
        dimension_numbers=('NCH', 'OIH', 'NCH'))
    return (out + bias[None, :, None]).astype(x.dtype)


def downsample_avgpool_reference(x, *, factor=4):
    B, C, L = x.shape
    L_out = L // factor
    xt = x[:, :, :L_out * factor].reshape(B, C, L_out, factor)
    return jnp.mean(xt.astype(jnp.float32), axis=-1).astype(x.dtype)


if __name__ == "__main__":
    key = jax.random.PRNGKey(0)
    k1, k2, k3, k4 = jax.random.split(key, 4)

    # use_conv=True: Conv1d(32 -> 64, ksize=5, stride=4, padding=2), L=1024 -> L_out=256
    B, C, O, L = 2, 32, 64, 1024
    x = jax.random.normal(k1, (B, C, L), dtype=jnp.float32)
    w = 0.05 * jax.random.normal(k2, (O, C, 5), dtype=jnp.float32)
    b = 0.05 * jax.random.normal(k3, (O,), dtype=jnp.float32)

    out = jax.block_until_ready(downsample_forward(x, use_conv=True, weight=w, bias=b))
    ref = downsample_conv_reference(x, w, b)
    assert out.shape == ref.shape == (B, O, 256)
    assert jnp.allclose(out, ref, atol=1e-4, rtol=1e-4)

    # unaligned length (exercises lane padding): L=250 -> L_out=63 (padded to 128 internally)
    x2 = jax.random.normal(k4, (B, C, 250), dtype=jnp.float32)
    out2 = jax.block_until_ready(downsample_forward(x2, use_conv=True, weight=w, bias=b))
    ref2 = downsample_conv_reference(x2, w, b)
    assert out2.shape == ref2.shape == (B, O, 63)
    assert jnp.allclose(out2, ref2, atol=1e-4, rtol=1e-4)

    # use_conv=False: AvgPool1d(kernel_size=4, stride=4), L=1024 -> L_out=256
    out3 = jax.block_until_ready(downsample_forward(x, use_conv=False))
    ref3 = downsample_avgpool_reference(x)
    assert out3.shape == ref3.shape == (B, C, 256)
    assert jnp.allclose(out3, ref3, atol=1e-5, rtol=1e-5)

    print("KERNEL_OK")
</pallas_src>

<mosaic_0001>
module attributes {stable_mosaic.version = 11 : i64} {
  func.func @_downsample_conv_kernel(%arg0: i32, %arg1: i32, %arg2: memref<1x160x256xf32, #tpu.memory_space<vmem>>, %arg3: memref<64x160xf32, #tpu.memory_space<vmem>>, %arg4: memref<64x1xf32, #tpu.memory_space<vmem>>, %arg5: memref<1x64x256xf32, #tpu.memory_space<vmem>>) attributes {dimension_semantics = [#tpu.dimension_semantics<parallel>, #tpu.dimension_semantics<parallel>], iteration_bounds = array<i64: 2, 1>, scalar_prefetch = 0 : i64, scratch_operands = 0 : i64, tpu.core_type = #tpu.core_type<tc>, window_params = [{transform_indices = @transform_0, window_bounds = array<i64: 1, 160, 256>}, {pipeline_mode = #tpu.pipeline_mode<synchronous>, transform_indices = @transform_1, window_bounds = array<i64: 64, 160>}, {pipeline_mode = #tpu.pipeline_mode<synchronous>, transform_indices = @transform_2, window_bounds = array<i64: 64, 1>}, {transform_indices = @transform_3, window_bounds = array<i64: 1, 64, 256>}]} {
    %c0 = arith.constant 0 : index
    %c0_0 = arith.constant 0 : index
    %0 = vector.load %arg3[%c0, %c0_0] : memref<64x160xf32, #tpu.memory_space<vmem>>, vector<64x160xf32>
    %c0_1 = arith.constant 0 : index
    %c0_2 = arith.constant 0 : index
    %c0_3 = arith.constant 0 : index
    %1 = vector.load %arg2[%c0_1, %c0_2, %c0_3] : memref<1x160x256xf32, #tpu.memory_space<vmem>>, vector<1x160x256xf32>
    %2 = vector.shape_cast %1 : vector<1x160x256xf32> to vector<160x256xf32>
    %cst = arith.constant dense<0.000000e+00> : vector<64x256xf32>
    %3 = tpu.matmul %0, %2, %cst {dimension_numbers = #tpu.dot_dimension_numbers<[1], [0], [0], [1], [0, 0, 1, 1], [], []>} : vector<64x160xf32>, vector<160x256xf32>, vector<64x256xf32> -> vector<64x256xf32>
    %c0_4 = arith.constant 0 : index
    %c0_5 = arith.constant 0 : index
    %4 = vector.load %arg4[%c0_4, %c0_5] : memref<64x1xf32, #tpu.memory_space<vmem>>, vector<64x1xf32>
    %5 = vector.broadcast %4 : vector<64x1xf32> to vector<64x256xf32>
    %6 = arith.addf %3, %5 : vector<64x256xf32>
    %c0_6 = arith.constant 0 : index
    %c0_7 = arith.constant 0 : index
    %c0_8 = arith.constant 0 : index
    %7 = vector.load %arg5[%c0_6, %c0_7, %c0_8] : memref<1x64x256xf32, #tpu.memory_space<vmem>>, vector<1x64x256xf32>
    %8 = vector.shape_cast %7 : vector<1x64x256xf32> to vector<64x256xf32>
    %9 = vector.shape_cast %6 : vector<64x256xf32> to vector<1x64x256xf32>
    tpu.vector_store %arg5[%c0_6, %c0_7, %c0_8], %9 {strides = array<i32>} : memref<1x64x256xf32, #tpu.memory_space<vmem>>, vector<1x64x256xf32>,
    return
  }
  func.func @transform_0(%arg0: i32, %arg1: i32) -> (i32, i32, i32) {
    %c0_i32 = arith.constant 0 : i32
    %c0_i32_0 = arith.constant 0 : i32
    return %arg0, %c0_i32, %arg1 : i32, i32, i32
  }
  func.func @transform_1(%arg0: i32, %arg1: i32) -> (i32, i32) {
    %c0_i32 = arith.constant 0 : i32
    %c0_i32_0 = arith.constant 0 : i32
    %c0_i32_1 = arith.constant 0 : i32
    return %c0_i32, %c0_i32_0 : i32, i32
  }
  func.func @transform_2(%arg0: i32, %arg1: i32) -> (i32, i32) {
    %c0_i32 = arith.constant 0 : i32
    %c0_i32_0 = arith.constant 0 : i32
    %c0_i32_1 = arith.constant 0 : i32
    return %c0_i32, %c0_i32_0 : i32, i32
  }
  func.func @transform_3(%arg0: i32, %arg1: i32) -> (i32, i32, i32) {
    %c0_i32 = arith.constant 0 : i32
    %c0_i32_0 = arith.constant 0 : i32
    return %arg0, %c0_i32, %arg1 : i32, i32, i32
  }
}

</mosaic_0001>

<llo_original>
// kernel: tpu_custom_call.1
$region0: #{tpu_custom_call.1}
  #allocation0 [shape = 'u32[]', space=smem, size = 0x4, offset = 0x4, fixed_abs, tag = 'smem constant byte address 0x4 - core index']
  #allocation1 [shape = 'u32[144,128]{1,0:T(1,128)}', space=vmem, size = 0x12000, scoped, tag = 'internal scratch']
  %s0 = inlined_call_operand.hbm [shape: f32[2,160,256], index: 0, kind: input, shape index: {}]
  %s1 = inlined_call_operand.hbm [shape: f32[64,160], index: 1, kind: input, shape index: {}]
  %s2 = inlined_call_operand.vmem [shape: f32[64,1], index: 2, kind: input, shape index: {}]
  %s3 = inlined_call_operand.hbm [shape: f32[2,64,256], index: 3, kind: output, shape index: {}]
  %s4 = sld [smem:[#allocation0]]
  $region53: #{tpu_custom_call.1} parent=0
    _
  %s6 = ssub.s32 1, %s4
  %s7 = scalar_select 0, %s6, %s4
  $region1: #{tpu_custom_call.1} parent=0
    #allocation2 [shape = 'u8[327680]{0}', space=vmem, size = 0x50000, scoped, tag = 'input window, operand 0']
    #allocation3 [shape = 's32[2]{0}', space=sflag, size = 0x8, scoped, tag = 'scoped memory for tpu_custom_call.1']
    #allocation4 [shape = 's32[2]{0}', space=sflag, size = 0x8, scoped, tag = 'scoped memory for tpu_custom_call.1']
    #allocation5 [shape = 'u8[65536]{0}', space=vmem, size = 0x10000, scoped, tag = 'input window, operand 1, single buffered']
    #allocation6 [shape = 's32[1]{0}', space=sflag, size = 0x4, scoped, tag = 'scoped memory for tpu_custom_call.1']
    #allocation7 [shape = 'u8[131072]{0}', space=vmem, size = 0x20000, scoped, tag = 'output window, operand 0']
    %8 = vsyncpa [#allocation3], 0
    %s9 = scalar_lea.sflag [#allocation3], 1
    %10 = vsyncpa %s9, 0
    %11 = vsyncpa [#allocation6], 0
    %12 = vsyncpa [#allocation4], 0
    %s13 = scalar_lea.sflag [#allocation4], 1
    %14 = vsyncpa %s13, 0
    loop: start=0, step=1, limit=4
    $region2: #{tpu_custom_call.1} parent=1 // loop_pre_header
      _
    $region3: #{tpu_custom_call.1} parent=1 // loop_header
      %s16 = sphi 0, %s20
      %p17 = scmp.ge.s32.totalorder %s16, 4
      %s23 = sphi 0, %s35
      %s24 = sphi 0, %s31
      %s25 = sphi 0, %s23
      %s26 = sphi 0, %s24
      %s27 = sphi 0, %s25
      %s28 = sphi 0, %s26
      %s40 = sphi 0, %s42
      %s43 = sphi 0, %s40
      %s44 = sphi 0, %s43
      %s60 = sphi 0, %s44
      %s64 = sphi 0, %s64
      %s66 = sphi 0, %s64
      %s67 = sphi 0, %s66
      %s81 = sphi 0, %s67
      %s85 = sphi 0, %s85
      %s87 = sphi 0, %s85
      %s88 = sphi 0, %s87
      %s102 = sphi 0, %s88
      %s110 = sphi 0, %s112
      %s113 = sphi 0, %s110
      %s114 = sphi 0, %s113
      %s130 = sphi 0, %s114
    $region4: #{tpu_custom_call.1} parent=1 // loop_header_branch
      %19 = sbr.rel (%p17) target = $region8
    $region5: #{tpu_custom_call.1} parent=1 // loop_body
      %s21 = ssub.s32 %s16, 1
      %s22 = ssub.s32 %s16, 2
      %s29 = sadd.s32 1, %s24
      %p30 = scmp.ge.s32.totalorder %s29, 1
      %s31 = scalar_select %p30, 0, %s29
      %s32 = sadd.s32 1, %s23
      %s33 = scalar_select %p30, %s32, %s23
      %p34 = scmp.ge.s32.totalorder %s33, 2
      %s35 = scalar_select %p34, 0, %s33
      %s36 = ssub.s32 %s23, %s35
      %s37 = ssub.s32 %s24, %s31
      %s38 = sor.u32 %s36, %s37
      %p39 = scmp.eq.s32.totalorder %s38, 0
      %s41 = sadd.s32 %s40, 1
      %s42 = scalar_select %p39, %s40, %s41
      %p45 = pneg %p39
      %p46 = scmp.eq.s32.totalorder %s16, 1
      %p47 = por %p45, %p46
      %p48 = scmp.ne.s32.totalorder %s40, %s43
      %p49 = scmp.eq.s32.totalorder %s16, 0
      %p50 = por %p48, %p49
      %p51 = scmp.ne.s32.totalorder %s40, %s43
      %p52 = scmp.eq.s32.totalorder %s21, 1
      %p53 = por %p51, %p52
      %p54 = scmp.ne.s32.totalorder %s43, %s44
      %p55 = scmp.eq.s32.totalorder %s21, 0
      %p56 = por %p54, %p55
      %p57 = scmp.ne.s32.totalorder %s43, %s44
      %p58 = scmp.eq.s32.totalorder %s22, 1
      %p59 = por %p57, %p58
      %p61 = scmp.ne.s32.totalorder %s44, %s60
      %p62 = scmp.eq.s32.totalorder %s22, 0
      %p63 = por %p61, %p62
      %s65 = sadd.s32 %s64, 1
      %p68 = scmp.eq.s32.totalorder %s16, 1
      %p69 = scmp.ne.s32.totalorder %s64, %s66
      %p70 = scmp.eq.s32.totalorder %s16, 0
      %p71 = por %p69, %p70
      %p72 = scmp.ne.s32.totalorder %s64, %s66
      %p73 = scmp.eq.s32.totalorder %s21, 1
      %p74 = por %p72, %p73
      %p75 = scmp.ne.s32.totalorder %s66, %s67
      %p76 = scmp.eq.s32.totalorder %s21, 0
      %p77 = por %p75, %p76
      %p78 = scmp.ne.s32.totalorder %s66, %s67
      %p79 = scmp.eq.s32.totalorder %s22, 1
      %p80 = por %p78, %p79
      %p82 = scmp.ne.s32.totalorder %s67, %s81
      %p83 = scmp.eq.s32.totalorder %s22, 0
      %p84 = por %p82, %p83
      %s86 = sadd.s32 %s85, 1
      %p89 = scmp.eq.s32.totalorder %s16, 1
      %p90 = scmp.ne.s32.totalorder %s85, %s87
      %p91 = scmp.eq.s32.totalorder %s16, 0
      %p92 = por %p90, %p91
      %p93 = scmp.ne.s32.totalorder %s85, %s87
      %p94 = scmp.eq.s32.totalorder %s21, 1
      %p95 = por %p93, %p94
      %p96 = scmp.ne.s32.totalorder %s87, %s88
      %p97 = scmp.eq.s32.totalorder %s21, 0
      %p98 = por %p96, %p97
      %p99 = scmp.ne.s32.totalorder %s87, %s88
      %p100 = scmp.eq.s32.totalorder %s22, 1
      %p101 = por %p99, %p100
      %p103 = scmp.ne.s32.totalorder %s88, %s102
      %p104 = scmp.eq.s32.totalorder %s22, 0
      %p105 = por %p103, %p104
      %s106 = ssub.s32 %s23, %s35
      %s107 = ssub.s32 %s24, %s31
      %s108 = sor.u32 %s106, %s107
      %p109 = scmp.eq.s32.totalorder %s108, 0
      %s111 = sadd.s32 %s110, 1
      %s112 = scalar_select %p109, %s110, %s111
      %p115 = pneg %p109
      %p116 = scmp.eq.s32.totalorder %s16, 1
      %p117 = por %p115, %p116
      %p118 = scmp.ne.s32.totalorder %s110, %s113
      %p119 = scmp.eq.s32.totalorder %s16, 0
      %p120 = por %p118, %p119
      %p121 = scmp.ne.s32.totalorder %s110, %s113
      %p122 = scmp.eq.s32.totalorder %s21, 1
      %p123 = por %p121, %p122
      %p124 = scmp.ne.s32.totalorder %s113, %s114
      %p125 = scmp.eq.s32.totalorder %s21, 0
      %p126 = por %p124, %p125
      %p127 = scmp.ne.s32.totalorder %s113, %s114
      %p128 = scmp.eq.s32.totalorder %s22, 1
      %p129 = por %p127, %p128
      %p131 = scmp.ne.s32.totalorder %s114, %s130
      %p132 = scmp.eq.s32.totalorder %s22, 0
      %p133 = por %p131, %p132
      %p134 = scmp.le.s32.totalorder 1, %s16
      %p135 = scmp.lt.s32.totalorder %s16, 3
      %p136 = pnand %p134, %p135
      %p137 = pneg %p136
      // Predicated region
      $region9: #{tpu_custom_call.1} parent=5 // pred_check
        _
      $region10: #{tpu_custom_call.1} parent=5 // pred_check_branch
        %139 = sbr.rel (%p136) target = $region12
      $region11: #{tpu_custom_call.1} parent=5 // pred_region
        %s140 = ssub.s32 %s16, 1
        // Predicated region
        $region13: #{tpu_custom_call.1} parent=11 // pred_check
          %p141 = pneg %p77
        $region14: #{tpu_custom_call.1} parent=11 // pred_check_branch
          %143 = sbr.rel (%p141) target = $region16
        $region15: #{tpu_custom_call.1} parent=11 // pred_region
          %s145 = ssub.s32 2048, 2048
          %146 = vsyncadd [#allocation6], %s145
          %s147 = sshll.u32 [#allocation5], 4
          %s148 = int_to_ptr.vmem [resolvable:$true] %s147
          %153 = dma.hbm_to_vmem [thread:$0]  %s1, 2048, %s148, [#allocation6], 256, 256, 16
        $region16: #{tpu_custom_call.1} parent=11 // pred_fallthru
          _
        // Predicated region
        $region17: #{tpu_custom_call.1} parent=11 // pred_check
          %p154 = pneg %p98
        $region18: #{tpu_custom_call.1} parent=11 // pred_check_branch
          %156 = sbr.rel (%p154) target = $region20
        $region19: #{tpu_custom_call.1} parent=11 // pred_region
          _
        $region20: #{tpu_custom_call.1} parent=11 // pred_fallthru
          _
      $region12: #{tpu_custom_call.1} parent=5 // pred_fallthru
        _
      %p157 = scmp.lt.s32.totalorder %s16, 2
      // Predicated region
      $region21: #{tpu_custom_call.1} parent=5 // pred_check
        %p158 = pneg %p157
      $region22: #{tpu_custom_call.1} parent=5 // pred_check_branch
        %160 = sbr.rel (%p158) target = $region24
      $region23: #{tpu_custom_call.1} parent=5 // pred_region
        // Predicated region
        $region25: #{tpu_custom_call.1} parent=23 // pred_check
          %p161 = pneg %p50
        $region26: #{tpu_custom_call.1} parent=23 // pred_check_branch
          %163 = sbr.rel (%p161) target = $region28
        $region27: #{tpu_custom_call.1} parent=23 // pred_region
          %s164 = sand.u32 %s40, 1
          %s165 = scalar_lea.sflag [#allocation3], %s164
          %s166 = sand.u32 %s40, 1
          %s167 = smul.addr %s166, 320
          %s168 = scalar_lea.vmem [#allocation2], %s167
          %s169 = smul.u32 2, %s24
          %s171 = ssub.s32 5120, 5120
          %172 = vsyncadd %s165, %s171
          %s173 = smul.addr %s23, 40
          %s174 = sadd.s32 %s169, %s173
          %s175 = smul.addr %s174, 128
          %s176 = scalar_lea.hbm %s0, %s175
          %s177 = sshll.u32 %s168, 4
          %s178 = int_to_ptr.vmem [resolvable:$true] %s177
          %183 = dma.hbm_to_vmem [thread:$0]  %s176, 5120, %s178, %s165, 256, 256, 16
        $region28: #{tpu_custom_call.1} parent=23 // pred_fallthru
          _
      $region24: #{tpu_custom_call.1} parent=5 // pred_fallthru
        _
      %p184 = scmp.le.s32.totalorder 1, %s16
      %p185 = scmp.lt.s32.totalorder %s16, 3
      %p186 = pnand %p184, %p185
      %p187 = pneg %p186
      // Predicated region
      $region29: #{tpu_custom_call.1} parent=5 // pred_check
        _
      $region30: #{tpu_custom_call.1} parent=5 // pred_check_branch
        %189 = sbr.rel (%p186) target = $region32
      $region31: #{tpu_custom_call.1} parent=5 // pred_region
        %s190 = ssub.s32 %s16, 1
        %s191 = sand.u32 %s43, 1
        %s192 = scalar_lea.sflag [#allocation3], %s191
        %s193 = sand.u32 %s43, 1
        %s194 = smul.addr %s193, 320
        %s195 = scalar_lea.vmem [#allocation2], %s194
        // Predicated region
        $region33: #{tpu_custom_call.1} parent=31 // pred_check
          %p196 = pneg %p56
        $region34: #{tpu_custom_call.1} parent=31 // pred_check_branch
          %198 = sbr.rel (%p196) target = $region36
        $region35: #{tpu_custom_call.1} parent=31 // pred_region
          %199 = dma.done %s192, 5120
        $region36: #{tpu_custom_call.1} parent=31 // pred_fallthru
          _
        // Predicated region
        $region37: #{tpu_custom_call.1} parent=31 // pred_check
          %p200 = pneg %p77
        $region38: #{tpu_custom_call.1} parent=31 // pred_check_branch
          %202 = sbr.rel (%p200) target = $region40
        $region39: #{tpu_custom_call.1} parent=31 // pred_region
          %203 = dma.done [#allocation6], 2048
        $region40: #{tpu_custom_call.1} parent=31 // pred_fallthru
          _
        %s204 = sand.u32 %s43, 1
        %s205 = scalar_lea.sflag [#allocation3], %s204
        %s206 = sand.u32 %s43, 1
        %s207 = smul.addr %s206, 320
        %s208 = scalar_lea.vmem [#allocation2], %s207
        %p209 = pneg %p56
        %p210 = pneg %p53
        %p211 = pneg %p77
        %p212 = pneg %p74
        %p213 = pneg %p98
        %p214 = pneg %p95
        %p215 = pneg %p126
        %p216 = pneg %p123
        %s217 = sand.u32 %s113, 1
        %s218 = scalar_lea.sflag [#allocation4], %s217
        %s219 = sand.u32 %s113, 1
        %s220 = smul.addr %s219, 128
        %s221 = scalar_lea.vmem [#allocation7], %s220
        %s222 = smul.u32 2, %s26
        %s223 = smul.u32 2, %s26
        %v224 = vld [vmem:[#allocation5] sm:$0xff]
        %v225 = vld [vmem:[#allocation5 + $0x8] sm:$0xff]
        %v226 = vld [vmem:[#allocation5 + $0x10] sm:$0xff]
        %v227 = vld [vmem:[#allocation5 + $0x18] sm:$0xff]
        %v228 = vld [vmem:[#allocation5 + $0x20] sm:$0xff]
        %v229 = vld [vmem:[#allocation5 + $0x28] sm:$0xff]
        %v230 = vld [vmem:[#allocation5 + $0x30] sm:$0xff]
        %v231 = vld [vmem:[#allocation5 + $0x38] sm:$0xff]
        %v232 = vld [vmem:[#allocation5 + $0x40] sm:$0xff]
        %v233 = vld [vmem:[#allocation5 + $0x48] sm:$0xff]
        %v234 = vld [vmem:[#allocation5 + $0x50] sm:$0xff]
        %v235 = vld [vmem:[#allocation5 + $0x58] sm:$0xff]
        %v236 = vld [vmem:[#allocation5 + $0x60] sm:$0xff]
        %v237 = vld [vmem:[#allocation5 + $0x68] sm:$0xff]
        %v238 = vld [vmem:[#allocation5 + $0x70] sm:$0xff]
        %v239 = vld [vmem:[#allocation5 + $0x78] sm:$0xff]
        %v240 = vld [vmem:[%s195] sm:$0xff]
        %v241 = vld [vmem:[%s195 + $0x8] sm:$0xff]
        %v242 = vld [vmem:[%s195 + $0x10] sm:$0xff]
        %v243 = vld [vmem:[%s195 + $0x18] sm:$0xff]
        %v244 = vld [vmem:[%s195 + $0x20] sm:$0xff]
        %v245 = vld [vmem:[%s195 + $0x28] sm:$0xff]
        %v246 = vld [vmem:[%s195 + $0x30] sm:$0xff]
        %v247 = vld [vmem:[%s195 + $0x38] sm:$0xff]
        %v248 = vld [vmem:[%s195 + $0x40] sm:$0xff]
        %v249 = vld [vmem:[%s195 + $0x48] sm:$0xff]
        %v250 = vld [vmem:[%s195 + $0x50] sm:$0xff]
        %v251 = vld [vmem:[%s195 + $0x58] sm:$0xff]
        %v252 = vld [vmem:[%s195 + $0x60] sm:$0xff]
        %v253 = vld [vmem:[%s195 + $0x68] sm:$0xff]
        %v254 = vld [vmem:[%s195 + $0x70] sm:$0xff]
        %v255 = vld [vmem:[%s195 + $0x78] sm:$0xff]
        %v256 = vld [vmem:[%s195 + $0x80] sm:$0xff]
        %v257 = vld [vmem:[%s195 + $0x88] sm:$0xff]
        %v258 = vld [vmem:[%s195 + $0x90] sm:$0xff]
        %v259 = vld [vmem:[%s195 + $0x98] sm:$0xff]
        %v260 = vld [vmem:[%s195 + $0xa0] sm:$0xff]
        %v261 = vld [vmem:[%s195 + $0xa8] sm:$0xff]
        %v262 = vld [vmem:[%s195 + $0xb0] sm:$0xff]
        %v263 = vld [vmem:[%s195 + $0xb8] sm:$0xff]
        %v264 = vld [vmem:[%s195 + $0xc0] sm:$0xff]
        %v265 = vld [vmem:[%s195 + $0xc8] sm:$0xff]
        %v266 = vld [vmem:[%s195 + $0xd0] sm:$0xff]
        %v267 = vld [vmem:[%s195 + $0xd8] sm:$0xff]
        %v268 = vld [vmem:[%s195 + $0xe0] sm:$0xff]
        %v269 = vld [vmem:[%s195 + $0xe8] sm:$0xff]
        %v270 = vld [vmem:[%s195 + $0xf0] sm:$0xff]
        %v271 = vld [vmem:[%s195 + $0xf8] sm:$0xff]
        %v272 = vld [vmem:[%s195 + $0x100] sm:$0xff]
        %v273 = vld [vmem:[%s195 + $0x108] sm:$0xff]
        %v274 = vld [vmem:[%s195 + $0x110] sm:$0xff]
        %v275 = vld [vmem:[%s195 + $0x118] sm:$0xff]
        %v276 = vld [vmem:[%s195 + $0x120] sm:$0xff]
        %v277 = vld [vmem:[%s195 + $0x128] sm:$0xff]
        %v278 = vld [vmem:[%s195 + $0x130] sm:$0xff]
        %v279 = vld [vmem:[%s195 + $0x138] sm:$0xff]
        %v280 = vld [vmem:[%s2] sm:$0xff]
        %v281 = vld [vmem:[%s2 + $0x8] sm:$0xff]
        %v282 = vld [vmem:[%s2 + $0x10] sm:$0xff]
        %v283 = vld [vmem:[%s2 + $0x18] sm:$0xff]
        %v284 = vld [vmem:[%s2 + $0x20] sm:$0xff]
        %v285 = vld [vmem:[%s2 + $0x28] sm:$0xff]
        %v286 = vld [vmem:[%s2 + $0x30] sm:$0xff]
        %v287 = vld [vmem:[%s2 + $0x38] sm:$0xff]
        %289 = vset.pattern.permute.xlu0 0
        %290 = vperm.xlu0 %289, %v280
        %v291 = vpop.permute.xlu0 %290
        %294 = vset.pattern.permute.xlu0 0
        %295 = vperm.xlu0 %294, %v281
        %v296 = vpop.permute.xlu0 %295
        %299 = vset.pattern.permute.xlu0 0
        %300 = vperm.xlu0 %299, %v282
        %v301 = vpop.permute.xlu0 %300
        %304 = vset.pattern.permute.xlu0 0
        %305 = vperm.xlu0 %304, %v283
        %v306 = vpop.permute.xlu0 %305
        %309 = vset.pattern.permute.xlu0 0
        %310 = vperm.xlu0 %309, %v284
        %v311 = vpop.permute.xlu0 %310
        %314 = vset.pattern.permute.xlu0 0
        %315 = vperm.xlu0 %314, %v285
        %v316 = vpop.permute.xlu0 %315
        %319 = vset.pattern.permute.xlu0 0
        %320 = vperm.xlu0 %319, %v286
        %v321 = vpop.permute.xlu0 %320
        %324 = vset.pattern.permute.xlu0 0
        %325 = vperm.xlu0 %324, %v287
        %v326 = vpop.permute.xlu0 %325
        %vm328 = vcmask 261120
        %v330 = vsel %vm328, %v225, 0
        %v333 = vsel %vm328, %v227, 0
        %v336 = vsel %vm328, %v229, 0
        %v339 = vsel %vm328, %v231, 0
        %v342 = vsel %vm328, %v233, 0
        %v345 = vsel %vm328, %v235, 0
        %v348 = vsel %vm328, %v237, 0
        %v351 = vsel %vm328, %v239, 0
        %353 = vmatprep.subr.mxu0 %v241
        %354 = vmatpush1.msra.mxu0 %v240
        %355 = vmatprep.subr.mxu0 %v243
        %356 = vmatpush1.msra.mxu0 %v242
        %357 = vmatprep.subr.mxu0 %v245
        %358 = vmatpush1.msra.mxu0 %v244
        %359 = vmatprep.subr.mxu0 %v247
        %360 = vmatpush1.msra.mxu0 %v246
        %361 = vmatprep.subr.mxu0 %v249
        %362 = vmatpush1.msra.mxu0 %v248
        %363 = vmatprep.subr.mxu0 %v251
        %364 = vmatpush1.msra.mxu0 %v250
        %365 = vmatprep.subr.mxu0 %v253
        %366 = vmatpush1.msra.mxu0 %v252
        %367 = vmatprep.subr.mxu0 %v255
        %368 = vmatpush1.msra.mxu0 %v254
        %369 = vmatprep.subr.mxu0 %v257
        %370 = vmatpush1.msra.mxu0 %v256
        %371 = vmatprep.subr.mxu0 %v259
        %372 = vmatpush1.msra.mxu0 %v258
        %373 = vmatprep.subr.mxu0 %v261
        %374 = vmatpush1.msra.mxu0 %v260
        %375 = vmatprep.subr.mxu0 %v263
        %376 = vmatpush1.msra.mxu0 %v262
        %377 = vmatprep.subr.mxu0 %v265
        %378 = vmatpush1.msra.mxu0 %v264
        %379 = vmatprep.subr.mxu0 %v267
        %380 = vmatpush1.msra.mxu0 %v266
        %381 = vmatprep.subr.mxu0 %v269
        %382 = vmatpush1.msra.mxu0 %v268
        %383 = vmatprep.subr.mxu0 %v271
        %384 = vmatpush1.msra.mxu0 %v270
        %385 = vmatprep.subr.mxu0 %v273
        %386 = vmatpush1.msra.mxu0 %v272
        %387 = vmatprep.subr.mxu0 %v275
        %388 = vmatpush1.msra.mxu0 %v274
        %389 = vmatprep.subr.mxu0 %v277
        %390 = vmatpush1.msra.mxu0 %v276
        %391 = vmatprep.subr.mxu0 %v279
        %392 = vmatpush1.msra.mxu0 %v278
        %393 = vmatprep.subr.mxu0 0.0
        %394 = vmatpush1.msra.mxu0 0.0
        %395 = vmatprep.subr.mxu0 0.0
        %396 = vmatpush1.msra.mxu0 0.0
        %397 = vmatprep.subr.mxu0 0.0
        %398 = vmatpush1.msra.mxu0 0.0
        %399 = vmatprep.subr.mxu0 0.0
        %400 = vmatpush1.msra.mxu0 0.0
        %401 = vmatprep.subr.mxu0 0.0
        %402 = vmatpush1.msra.mxu0 0.0
        %403 = vmatprep.subr.mxu0 0.0
        %404 = vmatpush1.msra.mxu0 0.0
        %405 = vmatprep.subr.mxu0 0.0
        %406 = vmatpush1.msra.mxu0 0.0
        %407 = vmatprep.subr.mxu0 0.0
        %408 = vmatpush1.msra.mxu0 0.0
        %409 = vmatprep.subr.mxu0 0.0
        %410 = vmatpush1.msra.mxu0 0.0
        %411 = vmatprep.subr.mxu0 0.0
        %412 = vmatpush1.msra.mxu0 0.0
        %413 = vmatprep.subr.mxu0 0.0
        %414 = vmatpush1.msra.mxu0 0.0
        %415 = vmatprep.subr.mxu0 0.0
        %416 = vmatpush1.msra.mxu0 0.0
        %417 = vmatprep.mubr.f32.mxu0 %v330
        %418 = vmatmul.mubr.f32.gmra.mrb[0].mxu0 %v224
        %v419 = vpop.f32.mrb[0].mxu0
        %v420 = vadd.f32 %v291, %v419
        %v421 = vpop.f32.mrb[0].mxu0
        %v422 = vadd.f32 %v291, %v421
        %423 = vmatprep.mubr.f32.mxu0 %v333
        %424 = vmatmul.mubr.f32.gmra.mrb[0].mxu0 %v226
        %v425 = vpop.f32.mrb[0].mxu0
        %v426 = vadd.f32 %v296, %v425
        %v427 = vpop.f32.mrb[0].mxu0
        %v428 = vadd.f32 %v296, %v427
        %429 = vmatprep.mubr.f32.mxu0 %v336
        %430 = vmatmul.mubr.f32.gmra.mrb[0].mxu0 %v228
        %v431 = vpop.f32.mrb[0].mxu0
        %v432 = vadd.f32 %v301, %v431
        %v433 = vpop.f32.mrb[0].mxu0
        %v434 = vadd.f32 %v301, %v433
        %435 = vmatprep.mubr.f32.mxu0 %v339
        %436 = vmatmul.mubr.f32.gmra.mrb[0].mxu0 %v230
        %v437 = vpop.f32.mrb[0].mxu0
        %v438 = vadd.f32 %v306, %v437
        %v439 = vpop.f32.mrb[0].mxu0
        %v440 = vadd.f32 %v306, %v439
        %441 = vmatprep.mubr.f32.mxu0 %v342
        %442 = vmatmul.mubr.f32.gmra.mrb[0].mxu0 %v232
        %v443 = vpop.f32.mrb[0].mxu0
        %v444 = vadd.f32 %v311, %v443
        %v445 = vpop.f32.mrb[0].mxu0
        %v446 = vadd.f32 %v311, %v445
        %447 = vmatprep.mubr.f32.mxu0 %v345
        %448 = vmatmul.mubr.f32.gmra.mrb[0].mxu0 %v234
        %v449 = vpop.f32.mrb[0].mxu0
        %v450 = vadd.f32 %v316, %v449
        %v451 = vpop.f32.mrb[0].mxu0
        %v452 = vadd.f32 %v316, %v451
        %453 = vmatprep.mubr.f32.mxu0 %v348
        %454 = vmatmul.mubr.f32.gmra.mrb[0].mxu0 %v236
        %v455 = vpop.f32.mrb[0].mxu0
        %v456 = vadd.f32 %v321, %v455
        %v457 = vpop.f32.mrb[0].mxu0
        %v458 = vadd.f32 %v321, %v457
        %459 = vmatprep.mubr.f32.mxu0 %v351
        %460 = vmatmul.mubr.f32.gmra.mrb[0].mxu0 %v238
        %v461 = vpop.f32.mrb[0].mxu0
        %v462 = vadd.f32 %v326, %v461
        %v463 = vpop.f32.mrb[0].mxu0
        %v464 = vadd.f32 %v326, %v463
        %465 = vdwg.mxu0
        %466 = vst [vmem:[%s221] sm:$0xff] %v420
        %467 = vst [vmem:[%s221 + $0x8] sm:$0xff] %v422
        %468 = vst [vmem:[%s221 + $0x10] sm:$0xff] %v426
        %469 = vst [vmem:[%s221 + $0x18] sm:$0xff] %v428
        %470 = vst [vmem:[%s221 + $0x20] sm:$0xff] %v432
        %471 = vst [vmem:[%s221 + $0x28] sm:$0xff] %v434
        %472 = vst [vmem:[%s221 + $0x30] sm:$0xff] %v438
        %473 = vst [vmem:[%s221 + $0x38] sm:$0xff] %v440
        %474 = vst [vmem:[%s221 + $0x40] sm:$0xff] %v444
        %475 = vst [vmem:[%s221 + $0x48] sm:$0xff] %v446
        %476 = vst [vmem:[%s221 + $0x50] sm:$0xff] %v450
        %477 = vst [vmem:[%s221 + $0x58] sm:$0xff] %v452
        %478 = vst [vmem:[%s221 + $0x60] sm:$0xff] %v456
        %479 = vst [vmem:[%s221 + $0x68] sm:$0xff] %v458
        %480 = vst [vmem:[%s221 + $0x70] sm:$0xff] %v462
        %481 = vst [vmem:[%s221 + $0x78] sm:$0xff] %v464
        %s482 = sand.u32 %s113, 1
        %s483 = scalar_lea.sflag [#allocation4], %s482
        %s484 = sand.u32 %s113, 1
        %s485 = smul.addr %s484, 128
        %s486 = scalar_lea.vmem [#allocation7], %s485
        // Predicated region
        $region41: #{tpu_custom_call.1} parent=31 // pred_check
          %p487 = pneg %p123
        $region42: #{tpu_custom_call.1} parent=31 // pred_check_branch
          %489 = sbr.rel (%p487) target = $region44
        $region43: #{tpu_custom_call.1} parent=31 // pred_region
          %s490 = smul.u32 2, %s26
          %s492 = ssub.s32 2048, 2048
          %493 = vsyncadd %s483, %s492
          %s494 = smul.addr %s25, 16
          %s495 = sadd.s32 %s490, %s494
          %s496 = smul.addr %s495, 128
          %s497 = scalar_lea.hbm %s3, %s496
          %s498 = sshll.u32 %s486, 4
          %s499 = int_to_ptr.vmem [resolvable:$true] %s498
          %504 = dma.vmem_to_hbm [thread:$0]  %s499, 2048, %s497, %s483, 256, 256, 16
        $region44: #{tpu_custom_call.1} parent=31 // pred_fallthru
          _
      $region32: #{tpu_custom_call.1} parent=5 // pred_fallthru
        _
      %p505 = scmp.le.s32.totalorder 2, %s16
      // Predicated region
      $region45: #{tpu_custom_call.1} parent=5 // pred_check
        %p506 = pneg %p505
      $region46: #{tpu_custom_call.1} parent=5 // pred_check_branch
        %508 = sbr.rel (%p506) target = $region48
      $region47: #{tpu_custom_call.1} parent=5 // pred_region
        %s509 = ssub.s32 %s16, 2
        // Predicated region
        $region49: #{tpu_custom_call.1} parent=47 // pred_check
          %p510 = pneg %p129
        $region50: #{tpu_custom_call.1} parent=47 // pred_check_branch
          %512 = sbr.rel (%p510) target = $region52
        $region51: #{tpu_custom_call.1} parent=47 // pred_region
          %s513 = sand.u32 %s114, 1
          %s514 = scalar_lea.sflag [#allocation4], %s513
          %s515 = sand.u32 %s114, 1
          %s516 = smul.addr %s515, 128
          %s517 = scalar_lea.vmem [#allocation7], %s516
          %518 = dma.done %s514, 2048
        $region52: #{tpu_custom_call.1} parent=47 // pred_fallthru
          _
      $region48: #{tpu_custom_call.1} parent=5 // pred_fallthru
        _
    $region6: #{tpu_custom_call.1} parent=1 // loop_footer
      %s20 = sadd.s32 1, %s16
    $region7: #{tpu_custom_call.1} parent=1 // loop_footer_branch
      %15 = sbr.rel target = $region3
    $region8: #{tpu_custom_call.1} parent=1 // loop_exit
      _
    %519 = vsyncpa [#allocation3], 1
    %s520 = scalar_lea.sflag [#allocation3], 1
    %521 = vsyncpa %s520, 1
    %522 = vsyncpa [#allocation6], 1
    %523 = vsyncpa [#allocation4], 1
    %s524 = scalar_lea.sflag [#allocation4], 1
    %525 = vsyncpa %s524, 1

</llo_original>
